<compile_context>
chip_gen: v5e
topology: v5e:2x2
jax: 0.10.0
libtpu: 0.0.40
codegen_flags: <defaults>
</compile_context>

<pallas_src>
import jax
import jax.numpy as jnp
from jax.experimental import pallas as pl
from jax.experimental.pallas import tpu as pltpu


def prepare_linear_weight(weight, dtype=None):
    """One-time re-layout (and optional down-cast) of the nn.Linear weight.

    PyTorch stores nn.Linear weight as [out_features, in_features]; the kernel
    consumes it as [in_features, out_features] (plain [K, N] contraction, no
    per-tile transpose on the MXU path).  Do this once at parameter-load time —
    the weight is reused across forward calls, so the re-layout (and an optional
    bf16 cast) is amortized.
    """
    w_t = jnp.swapaxes(weight, 0, 1)
    if dtype is not None:
        w_t = w_t.astype(dtype)
    return w_t


def _matmul_add_kernel(goal_norm_ref, goal_up_ref, w_t_ref, y_ref):
    # Grid = (N tiles, K tiles); K (reduction) is the inner axis, so k == 0 marks
    # the first visit of each VMEM-resident output tile.
    k = pl.program_id(1)

    @pl.when(k == 0)
    def _init():
        # Seed the accumulator with goal_norm: no separate finalize-add needed.
        y_ref[...] = goal_norm_ref[...].astype(jnp.float32)

    y_ref[...] += jnp.dot(
        goal_up_ref[...], w_t_ref[...], preferred_element_type=jnp.float32
    )


def _global_normalize_kernel(y_ref, out_ref):
    y = y_ref[...]
    mn = jnp.min(y)
    mx = jnp.max(y)
    inv = 1.0 / (mx - mn + 1e-9)  # scalar reciprocal; vector tail is one mul pass
    out_ref[...] = ((y - mn) * inv).astype(out_ref.dtype)


def _pick_tile(dim, cap):
    """Largest tile <= cap that tiles `dim` exactly.

    Prefers multiples of 128 (lane-dense stores, aligned DMA).  Only falls back to
    the full dim when `dim` is small or no multiple-of-128 divisor exists.
    """
    if dim <= cap:
        return dim
    t = (cap // 128) * 128
    while t >= 128:
        if dim % t == 0:
            return t
        t -= 128
    # TODO(synk): pad hidden_dim to a multiple of 128 and mask the pad lanes out of
    # the global min/max instead of taking a full-dim tile for pathological H.
    return dim


def hierarchy3_back_forward(goal_norm, goal_up, hierarchies_selected, weight_t,
                            *, block_n=1024, block_k=512):
    """Forward pass of Hierarchy3_back.

    goal_norm, goal_up : [num_workers, hidden_dim]
    weight_t           : [hidden_dim, hidden_dim] pre-transposed nn.Linear weight
                         ([in, out] layout; see prepare_linear_weight).
    hierarchies_selected is only detached/reshaped by the torch module and does not
    affect the returned goal, so it never enters the kernels.
    """
    del hierarchies_selected  # no effect on the output
    num_workers, hidden_dim = goal_up.shape

    tn = _pick_tile(hidden_dim, block_n)
    tk = _pick_tile(hidden_dim, block_k)
    n_n = hidden_dim // tn
    n_k = hidden_dim // tk

    w_bytes = jnp.dtype(weight_t.dtype).itemsize
    act_bytes = jnp.dtype(goal_up.dtype).itemsize
    vmem_needed = (
        2 * tk * tn * w_bytes                  # double-buffered weight tiles
        + 2 * num_workers * tk * act_bytes     # goal_up K tiles
        + 2 * num_workers * tn * act_bytes     # goal_norm N tiles
        + 2 * num_workers * tn * 4             # resident f32 output tile
    )
    vmem_limit = int(min(64 * 2**20, max(4 * vmem_needed, 16 * 2**20)))

    # Pass 1: y = goal_up @ W.T + goal_norm.  N axis "parallel" (megacore),
    # K reduction accumulates directly into the VMEM-resident f32 output tile.
    y = pl.pallas_call(
        _matmul_add_kernel,
        out_shape=jax.ShapeDtypeStruct((num_workers, hidden_dim), jnp.float32),
        grid_spec=pltpu.PrefetchScalarGridSpec(
            num_scalar_prefetch=0,
            grid=(n_n, n_k),
            in_specs=[
                pl.BlockSpec((num_workers, tn), lambda j, k: (0, j)),  # goal_norm
                pl.BlockSpec((num_workers, tk), lambda j, k: (0, k)),  # goal_up
                pl.BlockSpec((tk, tn), lambda j, k: (k, j)),           # weight [K, N]
            ],
            out_specs=pl.BlockSpec((num_workers, tn), lambda j, k: (0, j)),
        ),
        compiler_params=pltpu.CompilerParams(
            dimension_semantics=("parallel", "arbitrary"),
            vmem_limit_bytes=vmem_limit,
        ),
    )(goal_norm, goal_up, weight_t)

    # Pass 2: GLOBAL (whole-tensor) min/max normalize.  y is only
    # [num_workers, hidden_dim] — negligible HBM traffic next to the HxH weight
    # stream — so a single full-block step keeps the global coupling out of the
    # parallel pass.
    goal = pl.pallas_call(
        _global_normalize_kernel,
        out_shape=jax.ShapeDtypeStruct((num_workers, hidden_dim), goal_up.dtype),
        grid=(1,),
        in_specs=[pl.BlockSpec((num_workers, hidden_dim), lambda i: (0, 0))],
        out_specs=pl.BlockSpec((num_workers, hidden_dim), lambda i: (0, 0)),
    )(y)
    return goal


def _reference(goal_norm, goal_up, weight):
    y = goal_up @ weight.T + goal_norm
    mn, mx = jnp.min(y), jnp.max(y)
    return (y - mn) / (mx - mn + 1e-9)


if __name__ == "__main__":
    num_workers = 8
    hidden_dim = 32

    key = jax.random.PRNGKey(0)
    k1, k2, k3, k4 = jax.random.split(key, 4)

    goal_norm = jax.random.normal(k1, (num_workers, hidden_dim), dtype=jnp.float32)
    goal_up = jax.random.normal(k2, (num_workers, hidden_dim), dtype=jnp.float32)
    hierarchies_selected = jax.random.randint(k3, (num_workers,), 0, 3).astype(jnp.float32)
    # nn.Linear(hidden, hidden, bias=False) weight: uniform(-1/sqrt(H), 1/sqrt(H))
    bound = 1.0 / (hidden_dim ** 0.5)
    weight = jax.random.uniform(
        k4, (hidden_dim, hidden_dim), dtype=jnp.float32, minval=-bound, maxval=bound
    )

    # One-time weight re-layout (would live at parameter-load time in deployment).
    # TODO(synk): dtype=jnp.bfloat16 for production (~2x on this HBM-bound kernel);
    # kept f32 to preserve the 1e-5 reference tolerance here.
    weight_t = prepare_linear_weight(weight)

    out = hierarchy3_back_forward(goal_norm, goal_up, hierarchies_selected, weight_t)
    out = jax.block_until_ready(out)

    ref = _reference(goal_norm, goal_up, weight)
    assert out.shape == (num_workers, hidden_dim)
    assert jnp.allclose(out, ref, atol=1e-5, rtol=1e-5)

    print("KERNEL_OK")
</pallas_src>

<mosaic_0001>
module attributes {stable_mosaic.version = 11 : i64} {
  func.func @_matmul_add_kernel(%arg0: i32, %arg1: i32, %arg2: memref<8x32xf32, #tpu.memory_space<vmem>>, %arg3: memref<8x32xf32, #tpu.memory_space<vmem>>, %arg4: memref<32x32xf32, #tpu.memory_space<vmem>>, %arg5: memref<8x32xf32, #tpu.memory_space<vmem>>) attributes {dimension_semantics = [#tpu.dimension_semantics<parallel>, #tpu.dimension_semantics<arbitrary>], iteration_bounds = array<i64: 1, 1>, scalar_prefetch = 0 : i64, scratch_operands = 0 : i64, tpu.core_type = #tpu.core_type<tc>, window_params = [{transform_indices = @transform_0, window_bounds = array<i64: 8, 32>}, {transform_indices = @transform_1, window_bounds = array<i64: 8, 32>}, {transform_indices = @transform_2, window_bounds = array<i64: 32, 32>}, {transform_indices = @transform_3, window_bounds = array<i64: 8, 32>}]} {
    %c0_i32 = arith.constant 0 : i32
    %0 = arith.cmpi eq, %arg1, %c0_i32 : i32
    %1 = arith.extui %0 : i1 to i32
    %c0_i32_0 = arith.constant 0 : i32
    %2 = arith.cmpi ne, %1, %c0_i32_0 : i32
    scf.if %2 {
      %c0_8 = arith.constant 0 : index
      %c0_9 = arith.constant 0 : index
      %9 = vector.load %arg2[%c0_8, %c0_9] : memref<8x32xf32, #tpu.memory_space<vmem>>, vector<8x32xf32>
      %c0_10 = arith.constant 0 : index
      %c0_11 = arith.constant 0 : index
      %10 = vector.load %arg5[%c0_10, %c0_11] : memref<8x32xf32, #tpu.memory_space<vmem>>, vector<8x32xf32>
      tpu.vector_store %arg5[%c0_10, %c0_11], %9 {strides = array<i32>} : memref<8x32xf32, #tpu.memory_space<vmem>>, vector<8x32xf32>,
    } else {
    }
    %c0 = arith.constant 0 : index
    %c0_1 = arith.constant 0 : index
    %3 = vector.load %arg5[%c0, %c0_1] : memref<8x32xf32, #tpu.memory_space<vmem>>, vector<8x32xf32>
    %c0_2 = arith.constant 0 : index
    %c0_3 = arith.constant 0 : index
    %4 = vector.load %arg3[%c0_2, %c0_3] : memref<8x32xf32, #tpu.memory_space<vmem>>, vector<8x32xf32>
    %c0_4 = arith.constant 0 : index
    %c0_5 = arith.constant 0 : index
    %5 = vector.load %arg4[%c0_4, %c0_5] : memref<32x32xf32, #tpu.memory_space<vmem>>, vector<32x32xf32>
    %cst = arith.constant dense<0.000000e+00> : vector<8x32xf32>
    %6 = tpu.matmul %4, %5, %cst {dimension_numbers = #tpu.dot_dimension_numbers<[1], [0], [0], [1], [0, 0, 1, 1], [], []>} : vector<8x32xf32>, vector<32x32xf32>, vector<8x32xf32> -> vector<8x32xf32>
    %7 = arith.addf %3, %6 : vector<8x32xf32>
    %c0_6 = arith.constant 0 : index
    %c0_7 = arith.constant 0 : index
    %8 = vector.load %arg5[%c0_6, %c0_7] : memref<8x32xf32, #tpu.memory_space<vmem>>, vector<8x32xf32>
    tpu.vector_store %arg5[%c0_6, %c0_7], %7 {strides = array<i32>} : memref<8x32xf32, #tpu.memory_space<vmem>>, vector<8x32xf32>,
    return
  }
  func.func @transform_0(%arg0: i32, %arg1: i32) -> (i32, i32) {
    %c0_i32 = arith.constant 0 : i32
    %c0_i32_0 = arith.constant 0 : i32
    return %c0_i32, %arg0 : i32, i32
  }
  func.func @transform_1(%arg0: i32, %arg1: i32) -> (i32, i32) {
    %c0_i32 = arith.constant 0 : i32
    %c0_i32_0 = arith.constant 0 : i32
    return %c0_i32, %arg1 : i32, i32
  }
  func.func @transform_2(%arg0: i32, %arg1: i32) -> (i32, i32) {
    %c0_i32 = arith.constant 0 : i32
    return %arg1, %arg0 : i32, i32
  }
  func.func @transform_3(%arg0: i32, %arg1: i32) -> (i32, i32) {
    %c0_i32 = arith.constant 0 : i32
    %c0_i32_0 = arith.constant 0 : i32
    return %c0_i32, %arg0 : i32, i32
  }
}

</mosaic_0001>

<llo_original>
// kernel: tpu_custom_call.1
$region0: #{tpu_custom_call.1}
  #allocation0 [shape = 'u32[]', space=smem, size = 0x4, offset = 0x4, fixed_abs, tag = 'smem constant byte address 0x4 - core index']
  #allocation1 [shape = 'u32[72,128]{1,0:T(1,128)}', space=vmem, size = 0x9000, scoped, tag = 'internal scratch']
  %s0 = inlined_call_operand.hbm [shape: f32[8,32], index: 0, kind: input, shape index: {}]
  %s1 = inlined_call_operand.hbm [shape: f32[8,32], index: 1, kind: input, shape index: {}]
  %s2 = inlined_call_operand.hbm [shape: f32[32,32], index: 2, kind: input, shape index: {}]
  %s3 = inlined_call_operand.hbm [shape: f32[8,32], index: 3, kind: output, shape index: {}]
  %s4 = sld [smem:[#allocation0]]
  $region38: #{tpu_custom_call.1} parent=0
    _
  %s6 = ssub.s32 1, %s4
  %s7 = scalar_select 0, %s6, %s4
  $region1: #{tpu_custom_call.1} parent=0
    #allocation2 [shape = 'u8[4096]{0}', space=vmem, size = 0x1000, scoped, tag = 'input window, operand 0, single buffered']
    #allocation3 [shape = 's32[1]{0}', space=sflag, size = 0x4, scoped, tag = 'scoped memory for tpu_custom_call.1']
    #allocation4 [shape = 's32[1]{0}', space=sflag, size = 0x4, scoped, tag = 'scoped memory for tpu_custom_call.1']
    #allocation5 [shape = 'u8[4096]{0}', space=vmem, size = 0x1000, scoped, tag = 'input window, operand 1, single buffered']
    #allocation6 [shape = 's32[1]{0}', space=sflag, size = 0x4, scoped, tag = 'scoped memory for tpu_custom_call.1']
    #allocation7 [shape = 'u8[16384]{0}', space=vmem, size = 0x4000, scoped, tag = 'input window, operand 2, single buffered']
    #allocation8 [shape = 'u8[4096]{0}', space=vmem, size = 0x1000, scoped, tag = 'output window, operand 0, single buffered']
    %8 = vsyncpa [#allocation3], 0
    %9 = vsyncpa [#allocation6], 0
    %10 = vsyncpa [#allocation4], 0
    // Predicated region
    $region2: #{tpu_custom_call.1} parent=1 // pred_check
      _
    $region3: #{tpu_custom_call.1} parent=1 // pred_check_branch
      %12 = sbr.rel (0) target = $region5
    $region4: #{tpu_custom_call.1} parent=1 // pred_region
      %14 = vsyncadd [#allocation3], 0
      %s16 = sshll.u32 %s0, 4
      %s17 = int_to_ptr.hbm [resolvable:$true] %s16
      %s18 = sshll.u32 [#allocation2], 4
      %s19 = int_to_ptr.vmem [resolvable:$true] %s18
      %21 = dma.hbm_to_vmem [thread:$0]  %s17, 128, %s19, [#allocation3]
    $region5: #{tpu_custom_call.1} parent=1 // pred_fallthru
      _
    // Predicated region
    $region6: #{tpu_custom_call.1} parent=1 // pred_check
      _
    $region7: #{tpu_custom_call.1} parent=1 // pred_check_branch
      %23 = sbr.rel (0) target = $region9
    $region8: #{tpu_custom_call.1} parent=1 // pred_region
      %25 = vsyncadd [#allocation6], 0
      %s27 = sshll.u32 %s1, 4
      %s28 = int_to_ptr.hbm [resolvable:$true] %s27
      %s29 = sshll.u32 [#allocation5], 4
      %s30 = int_to_ptr.vmem [resolvable:$true] %s29
      %32 = dma.hbm_to_vmem [thread:$0]  %s28, 128, %s30, [#allocation6]
    $region9: #{tpu_custom_call.1} parent=1 // pred_fallthru
      _
    // Predicated region
    $region10: #{tpu_custom_call.1} parent=1 // pred_check
      _
    $region11: #{tpu_custom_call.1} parent=1 // pred_check_branch
      %34 = sbr.rel (0) target = $region13
    $region12: #{tpu_custom_call.1} parent=1 // pred_region
      %36 = vsyncadd [#allocation6], 0
      %s37 = sshll.u32 %s2, 4
      %s38 = int_to_ptr.hbm [resolvable:$true] %s37
      %s39 = sshll.u32 [#allocation7], 4
      %s40 = int_to_ptr.vmem [resolvable:$true] %s39
      %45 = dma.hbm_to_vmem [thread:$0]  %s38, 512, %s40, [#allocation6], 128, 128, 8
    $region13: #{tpu_custom_call.1} parent=1 // pred_fallthru
      _
    // Predicated region
    $region14: #{tpu_custom_call.1} parent=1 // pred_check
      _
    $region15: #{tpu_custom_call.1} parent=1 // pred_check_branch
      %47 = sbr.rel (0) target = $region17
    $region16: #{tpu_custom_call.1} parent=1 // pred_region
      %49 = dma.done [#allocation3], 128
    $region17: #{tpu_custom_call.1} parent=1 // pred_fallthru
      _
    // Predicated region
    $region18: #{tpu_custom_call.1} parent=1 // pred_check
      _
    $region19: #{tpu_custom_call.1} parent=1 // pred_check_branch
      %51 = sbr.rel (0) target = $region21
    $region20: #{tpu_custom_call.1} parent=1 // pred_region
      %53 = dma.done [#allocation6], 128
    $region21: #{tpu_custom_call.1} parent=1 // pred_fallthru
      _
    // Predicated region
    $region22: #{tpu_custom_call.1} parent=1 // pred_check
      _
    $region23: #{tpu_custom_call.1} parent=1 // pred_check_branch
      %55 = sbr.rel (0) target = $region25
    $region24: #{tpu_custom_call.1} parent=1 // pred_region
      %57 = dma.done [#allocation6], 512
    $region25: #{tpu_custom_call.1} parent=1 // pred_fallthru
      _
    %p58 = scmp.eq.s32.totalorder 0, 0
    // Predicated region
    $region26: #{tpu_custom_call.1} parent=1 // pred_check
      %p59 = pneg %p58
    $region27: #{tpu_custom_call.1} parent=1 // pred_check_branch
      %61 = sbr.rel (%p59) target = $region29
    $region28: #{tpu_custom_call.1} parent=1 // pred_region
      %v62 = vld [vmem:[#allocation2] sm:$0xff]
      %vm63 = vcmask 261120
      %64 = vst.msk [vmem:[#allocation8] sm:$0xff] %vm63, %v62
    $region29: #{tpu_custom_call.1} parent=1 // pred_fallthru
      _
    %v65 = vld [vmem:[#allocation8] sm:$0xff]
    %v66 = vld [vmem:[#allocation5] sm:$0xff]
    %v67 = vld [vmem:[#allocation7] sm:$0xff]
    %v68 = vld [vmem:[#allocation7 + $0x8] sm:$0xff]
    %v69 = vld [vmem:[#allocation7 + $0x10] sm:$0xff]
    %v70 = vld [vmem:[#allocation7 + $0x18] sm:$0xff]
    %vm71 = vcmask 261120
    %v73 = vsel %vm71, %v66, 0
    %75 = vmatpush.msra.mxu0 0.0
    %76 = vmatpush.msra.mxu0 0.0
    %77 = vmatpush.msra.mxu0 0.0
    %78 = vmatpush.msra.mxu0 0.0
    %79 = vmatpush.msra.mxu0 0.0
    %80 = vmatpush.msra.mxu0 0.0
    %81 = vmatpush.msra.mxu0 0.0
    %82 = vmatpush.msra.mxu0 0.0
    %83 = vmatpush.msra.mxu0 0.0
    %84 = vmatpush.msra.mxu0 0.0
    %85 = vmatpush.msra.mxu0 0.0
    %86 = vmatpush.msra.mxu0 0.0
    %87 = vmatpush.msra.mxu0 %v70
    %88 = vmatpush.msra.mxu0 %v69
    %89 = vmatpush.msra.mxu0 %v68
    %90 = vmatpush.msra.mxu0 %v67
    %91 = vmatmul.f32.gmra.mxu0 %v73
    %v92 = vpop.f32.mrf.mxu0
    %v93 = vadd.f32 0.0, %v92
    %94 = vdwg.mxu0
    %v95 = vadd.f32 %v65, %v93
    %96 = vst.msk [vmem:[#allocation8] sm:$0xff] %vm71, %v95
    // Predicated region
    $region30: #{tpu_custom_call.1} parent=1 // pred_check
      _
    $region31: #{tpu_custom_call.1} parent=1 // pred_check_branch
      %98 = sbr.rel (0) target = $region33
    $region32: #{tpu_custom_call.1} parent=1 // pred_region
      %100 = vsyncadd [#allocation4], 0
      %s102 = sshll.u32 [#allocation8], 4
      %s103 = int_to_ptr.vmem [resolvable:$true] %s102
      %s104 = sshll.u32 %s3, 4
      %s105 = int_to_ptr.hbm [resolvable:$true] %s104
      %107 = dma.vmem_to_hbm [thread:$0]  %s103, 128, %s105, [#allocation4]
    $region33: #{tpu_custom_call.1} parent=1 // pred_fallthru
      _
    // Predicated region
    $region34: #{tpu_custom_call.1} parent=1 // pred_check
      _
    $region35: #{tpu_custom_call.1} parent=1 // pred_check_branch
      %109 = sbr.rel (0) target = $region37
    $region36: #{tpu_custom_call.1} parent=1 // pred_region
      %111 = dma.done [#allocation4], 128
    $region37: #{tpu_custom_call.1} parent=1 // pred_fallthru
      _
    %112 = vsyncpa [#allocation3], 1
    %113 = vsyncpa [#allocation6], 1
    %114 = vsyncpa [#allocation4], 1

</llo_original>
